<compile_context>
chip_gen: v7x
topology: tpu7x:2x2x1
jax: 0.10.0
libtpu: 0.0.40
codegen_flags: <defaults>
</compile_context>

<pallas_src>
import jax
import jax.numpy as jnp
import numpy as np
from jax.experimental import pallas as pl
from jax.experimental.pallas import tpu as pltpu


_TILE_S_MAX = 512  # sublane rows (of 128 lanes) per spatial tile; f32 tile = 256 KiB


def _round_up(x, m):
    return ((x + m - 1) // m) * m


def _iou_kernel(pred_ref, target_ref, out_ref, iand_acc, sum_acc):
    s = pl.program_id(1)
    ns = pl.num_programs(1)          # static grid -> Python int (no .astype!)

    p = pred_ref[0]                  # (TILE_S, 128) f32
    t = target_ref[0]

    # Lane-resident partial reductions; defer the scalar collapse.
    iand_part = jnp.sum(t * p, axis=0, keepdims=True)   # (1, 128)
    sum_part = jnp.sum(t + p, axis=0, keepdims=True)    # (1, 128)  == sum(t)+sum(p)

    @pl.when(s == 0)
    def _():
        iand_acc[...] = jnp.zeros_like(iand_acc)
        sum_acc[...] = jnp.zeros_like(sum_acc)

    iand_acc[...] += iand_part
    sum_acc[...] += sum_part

    @pl.when(s == ns - 1)
    def _():
        iand = jnp.sum(iand_acc[...])
        ior = jnp.sum(sum_acc[...]) - iand
        # NaN when a sample is all-zero in both pred and target (ior == 0),
        # exactly matching the PyTorch reference.
        loss_i = 1.0 - iand / ior
        out_ref[...] = jnp.full(out_ref.shape, loss_i, dtype=out_ref.dtype)


def iou_loss(pred, target):
    """Pallas equivalent of IOU().forward(pred, target). Returns a scalar."""
    assert pred.shape == target.shape
    B = pred.shape[0]
    n = int(np.prod(pred.shape[1:]))

    # Lane-dense spatial layout: (B, rows, 128), rows a multiple of tile_s (>=8).
    rows = _round_up(-(-n // 128), 8)
    tile_s = min(_TILE_S_MAX, rows)
    padded_rows = _round_up(rows, tile_s)
    padded_n = padded_rows * 128
    num_tiles = padded_rows // tile_s

    def _prep(x):
        x = x.reshape(B, n).astype(jnp.float32)
        if padded_n != n:
            x = jnp.pad(x, ((0, 0), (0, padded_n - n)))  # zeros are sum-neutral
        return x.reshape(B, padded_rows, 128)

    p = _prep(pred)
    t = _prep(target)

    spec = pl.BlockSpec((1, tile_s, 128), lambda b, s: (b, s, 0))

    per_sample = pl.pallas_call(
        _iou_kernel,
        out_shape=jax.ShapeDtypeStruct((B, 8, 128), jnp.float32),
        grid=(B, num_tiles),
        in_specs=[spec, spec],
        out_specs=pl.BlockSpec((1, 8, 128), lambda b, s: (b, 0, 0)),
        scratch_shapes=[
            pltpu.VMEM((1, 128), jnp.float32),   # Iand partials
            pltpu.VMEM((1, 128), jnp.float32),   # sum(t)+sum(p) partials
        ],
        compiler_params=pltpu.CompilerParams(
            dimension_semantics=("parallel", "arbitrary"),
        ),
    )(p, t)

    # Final mean over batch in XLA (one scalar op) — matches `return IoU / b`.
    return jnp.mean(per_sample[:, 0, 0])


def _iou_reference(pred, target):
    # Pure-JAX reference mirroring the PyTorch `_iou` loop.
    b = pred.shape[0]
    iou = 0.0
    for i in range(b):
        iand = jnp.sum(target[i] * pred[i])
        ior = jnp.sum(target[i]) + jnp.sum(pred[i]) - iand
        iou = iou + (1.0 - iand / ior)
    return iou / b


if __name__ == "__main__":
    key = jax.random.PRNGKey(0)
    k1, k2 = jax.random.split(key)

    B, C, H, W = 2, 4, 16, 16
    # pred: sigmoid-like probabilities in (0, 1); target: binary mask.
    pred = jax.nn.sigmoid(jax.random.normal(k1, (B, C, H, W), dtype=jnp.float32))
    target = (jax.random.uniform(k2, (B, C, H, W)) > 0.5).astype(jnp.float32)

    loss = jax.block_until_ready(iou_loss(pred, target))
    ref = jax.block_until_ready(_iou_reference(pred, target))

    assert jnp.allclose(loss, ref, rtol=1e-5, atol=1e-5), (loss, ref)
    print("KERNEL_OK")
</pallas_src>

<mosaic_0001>
module attributes {stable_mosaic.version = 11 : i64} {
  func.func @_iou_kernel(%arg0: i32, %arg1: i32, %arg2: memref<1x8x128xf32, #tpu.memory_space<vmem>>, %arg3: memref<1x8x128xf32, #tpu.memory_space<vmem>>, %arg4: memref<1x8x128xf32, #tpu.memory_space<vmem>>, %arg5: memref<1x128xf32, #tpu.memory_space<vmem>>, %arg6: memref<1x128xf32, #tpu.memory_space<vmem>>) attributes {dimension_semantics = [#tpu.dimension_semantics<parallel>, #tpu.dimension_semantics<arbitrary>], iteration_bounds = array<i64: 2, 1>, scalar_prefetch = 0 : i64, scratch_operands = 2 : i64, tpu.core_type = #tpu.core_type<tc>, window_params = [{transform_indices = @transform_0, window_bounds = array<i64: 1, 8, 128>}, {transform_indices = @transform_1, window_bounds = array<i64: 1, 8, 128>}, {transform_indices = @transform_2, window_bounds = array<i64: 1, 8, 128>}]} {
    %c0 = arith.constant 0 : index
    %c0_0 = arith.constant 0 : index
    %c0_1 = arith.constant 0 : index
    %0 = vector.load %arg2[%c0, %c0_0, %c0_1] : memref<1x8x128xf32, #tpu.memory_space<vmem>>, vector<1x8x128xf32>
    %1 = vector.shape_cast %0 : vector<1x8x128xf32> to vector<8x128xf32>
    %c0_2 = arith.constant 0 : index
    %c0_3 = arith.constant 0 : index
    %c0_4 = arith.constant 0 : index
    %2 = vector.load %arg3[%c0_2, %c0_3, %c0_4] : memref<1x8x128xf32, #tpu.memory_space<vmem>>, vector<1x8x128xf32>
    %3 = vector.shape_cast %2 : vector<1x8x128xf32> to vector<8x128xf32>
    %4 = arith.mulf %3, %1 : vector<8x128xf32>
    %cst = arith.constant dense<0.000000e+00> : vector<128xf32>
    %5 = vector.multi_reduction <add>, %4, %cst [0] : vector<8x128xf32> to vector<128xf32>
    %6 = vector.shape_cast %5 : vector<128xf32> to vector<1x128xf32>
    %7 = arith.addf %3, %1 : vector<8x128xf32>
    %cst_5 = arith.constant dense<0.000000e+00> : vector<128xf32>
    %8 = vector.multi_reduction <add>, %7, %cst_5 [0] : vector<8x128xf32> to vector<128xf32>
    %9 = vector.shape_cast %8 : vector<128xf32> to vector<1x128xf32>
    %c0_i32 = arith.constant 0 : i32
    %10 = arith.cmpi eq, %arg1, %c0_i32 : i32
    %11 = arith.extui %10 : i1 to i32
    %c0_i32_6 = arith.constant 0 : i32
    %12 = arith.cmpi ne, %11, %c0_i32_6 : i32
    scf.if %12 {
      %cst_17 = arith.constant 0.000000e+00 : f32
      %22 = vector.broadcast %cst_17 : f32 to vector<1x128xf32>
      %c0_18 = arith.constant 0 : index
      %c0_19 = arith.constant 0 : index
      %23 = vector.load %arg5[%c0_18, %c0_19] : memref<1x128xf32, #tpu.memory_space<vmem>>, vector<1x128xf32>
      tpu.vector_store %arg5[%c0_18, %c0_19], %22 {strides = array<i32>} : memref<1x128xf32, #tpu.memory_space<vmem>>, vector<1x128xf32>,
      %cst_20 = arith.constant 0.000000e+00 : f32
      %24 = vector.broadcast %cst_20 : f32 to vector<1x128xf32>
      %c0_21 = arith.constant 0 : index
      %c0_22 = arith.constant 0 : index
      %25 = vector.load %arg6[%c0_21, %c0_22] : memref<1x128xf32, #tpu.memory_space<vmem>>, vector<1x128xf32>
      tpu.vector_store %arg6[%c0_21, %c0_22], %24 {strides = array<i32>} : memref<1x128xf32, #tpu.memory_space<vmem>>, vector<1x128xf32>,
    } else {
    }
    %c0_7 = arith.constant 0 : index
    %c0_8 = arith.constant 0 : index
    %13 = vector.load %arg5[%c0_7, %c0_8] : memref<1x128xf32, #tpu.memory_space<vmem>>, vector<1x128xf32>
    %14 = arith.addf %13, %6 : vector<1x128xf32>
    %c0_9 = arith.constant 0 : index
    %c0_10 = arith.constant 0 : index
    %15 = vector.load %arg5[%c0_9, %c0_10] : memref<1x128xf32, #tpu.memory_space<vmem>>, vector<1x128xf32>
    tpu.vector_store %arg5[%c0_9, %c0_10], %14 {strides = array<i32>} : memref<1x128xf32, #tpu.memory_space<vmem>>, vector<1x128xf32>,
    %c0_11 = arith.constant 0 : index
    %c0_12 = arith.constant 0 : index
    %16 = vector.load %arg6[%c0_11, %c0_12] : memref<1x128xf32, #tpu.memory_space<vmem>>, vector<1x128xf32>
    %17 = arith.addf %16, %9 : vector<1x128xf32>
    %c0_13 = arith.constant 0 : index
    %c0_14 = arith.constant 0 : index
    %18 = vector.load %arg6[%c0_13, %c0_14] : memref<1x128xf32, #tpu.memory_space<vmem>>, vector<1x128xf32>
    tpu.vector_store %arg6[%c0_13, %c0_14], %17 {strides = array<i32>} : memref<1x128xf32, #tpu.memory_space<vmem>>, vector<1x128xf32>,
    %c0_i32_15 = arith.constant 0 : i32
    %19 = arith.cmpi eq, %arg1, %c0_i32_15 : i32
    %20 = arith.extui %19 : i1 to i32
    %c0_i32_16 = arith.constant 0 : i32
    %21 = arith.cmpi ne, %20, %c0_i32_16 : i32
    scf.if %21 {
      %c0_17 = arith.constant 0 : index
      %c0_18 = arith.constant 0 : index
      %22 = vector.load %arg5[%c0_17, %c0_18] : memref<1x128xf32, #tpu.memory_space<vmem>>, vector<1x128xf32>
      %23 = vector.shape_cast %22 : vector<1x128xf32> to vector<1x1x128xf32>
      %cst_19 = arith.constant dense<0.000000e+00> : vector<1xf32>
      %24 = vector.multi_reduction <add>, %23, %cst_19 [1, 2] : vector<1x1x128xf32> to vector<1xf32>
      %25 = vector.shape_cast %24 : vector<1xf32> to vector<1x1x1xf32>
      %26 = vector.extract %25[0, 0, 0] : f32 from vector<1x1x1xf32>
      %c0_20 = arith.constant 0 : index
      %c0_21 = arith.constant 0 : index
      %27 = vector.load %arg6[%c0_20, %c0_21] : memref<1x128xf32, #tpu.memory_space<vmem>>, vector<1x128xf32>
      %28 = vector.shape_cast %27 : vector<1x128xf32> to vector<1x1x128xf32>
      %cst_22 = arith.constant dense<0.000000e+00> : vector<1xf32>
      %29 = vector.multi_reduction <add>, %28, %cst_22 [1, 2] : vector<1x1x128xf32> to vector<1xf32>
      %30 = vector.shape_cast %29 : vector<1xf32> to vector<1x1x1xf32>
      %31 = vector.extract %30[0, 0, 0] : f32 from vector<1x1x1xf32>
      %32 = arith.subf %31, %26 : f32
      %33 = arith.divf %26, %32 : f32
      %cst_23 = arith.constant 1.000000e+00 : f32
      %34 = arith.subf %cst_23, %33 : f32
      %35 = vector.broadcast %34 : f32 to vector<1x8x128xf32>
      %c0_24 = arith.constant 0 : index
      %c0_25 = arith.constant 0 : index
      %c0_26 = arith.constant 0 : index
      %36 = vector.load %arg4[%c0_24, %c0_25, %c0_26] : memref<1x8x128xf32, #tpu.memory_space<vmem>>, vector<1x8x128xf32>
      tpu.vector_store %arg4[%c0_24, %c0_25, %c0_26], %35 {strides = array<i32>} : memref<1x8x128xf32, #tpu.memory_space<vmem>>, vector<1x8x128xf32>,
    } else {
    }
    return
  }
  func.func @transform_0(%arg0: i32, %arg1: i32) -> (i32, i32, i32) {
    %c0_i32 = arith.constant 0 : i32
    %c0_i32_0 = arith.constant 0 : i32
    return %arg0, %arg1, %c0_i32 : i32, i32, i32
  }
  func.func @transform_1(%arg0: i32, %arg1: i32) -> (i32, i32, i32) {
    %c0_i32 = arith.constant 0 : i32
    %c0_i32_0 = arith.constant 0 : i32
    return %arg0, %arg1, %c0_i32 : i32, i32, i32
  }
  func.func @transform_2(%arg0: i32, %arg1: i32) -> (i32, i32, i32) {
    %c0_i32 = arith.constant 0 : i32
    %c0_i32_0 = arith.constant 0 : i32
    %c0_i32_1 = arith.constant 0 : i32
    return %arg0, %c0_i32, %c0_i32_0 : i32, i32, i32
  }
}

</mosaic_0001>

<llo_original>
// kernel: tpu_custom_call.1
$region0: #{tpu_custom_call.1}
  #allocation0 [shape = 'u32[]', space=smem, size = 0x4, offset = 0x4, fixed_abs, tag = 'smem constant byte address 0x4 - core index']
  #allocation1 [shape = 'u32[144,128]{1,0:T(1,128)}', space=vmem, size = 0x12000, scoped, tag = 'internal scratch']
  #allocation2 [shape = 'f32[1,128]{1,0:T(1,128)}', space=vmem, size = 0x200, scoped, tag = 'scratch operand']
  #allocation3 [shape = 'f32[1,128]{1,0:T(1,128)}', space=vmem, size = 0x200, scoped, tag = 'scratch operand']
  %s0 = inlined_call_operand.hbm [shape: f32[2,8,128], index: 0, kind: input, shape index: {}]
  %s1 = inlined_call_operand.hbm [shape: f32[2,8,128], index: 1, kind: input, shape index: {}]
  %s2 = inlined_call_operand.hbm [shape: f32[2,8,128], index: 2, kind: output, shape index: {}]
  %s3 = sld [smem:[#allocation0]]
  $region57: #{tpu_custom_call.1} parent=0
    _
  %s5 = ssub.s32 1, %s3
  %s6 = scalar_select 0, %s5, %s3
  $region1: #{tpu_custom_call.1} parent=0
    #allocation4 [shape = 'u8[8192]{0}', space=vmem, size = 0x2000, scoped, tag = 'input window, operand 0']
    #allocation5 [shape = 's32[2]{0}', space=sflag, size = 0x8, scoped, tag = 'scoped memory for tpu_custom_call.1']
    #allocation6 [shape = 's32[2]{0}', space=sflag, size = 0x8, scoped, tag = 'scoped memory for tpu_custom_call.1']
    #allocation7 [shape = 'u8[8192]{0}', space=vmem, size = 0x2000, scoped, tag = 'input window, operand 1']
    #allocation8 [shape = 's32[2]{0}', space=sflag, size = 0x8, scoped, tag = 'scoped memory for tpu_custom_call.1']
    #allocation9 [shape = 'u8[8192]{0}', space=vmem, size = 0x2000, scoped, tag = 'output window, operand 0']
    %7 = vsyncpa [#allocation5], 0
    %s8 = scalar_lea.sflag [#allocation5], 1
    %9 = vsyncpa %s8, 0
    %10 = vsyncpa [#allocation8], 0
    %s11 = scalar_lea.sflag [#allocation8], 1
    %12 = vsyncpa %s11, 0
    %13 = vsyncpa [#allocation6], 0
    %s14 = scalar_lea.sflag [#allocation6], 1
    %15 = vsyncpa %s14, 0
    loop: start=0, step=1, limit=4
    $region2: #{tpu_custom_call.1} parent=1 // loop_pre_header
      _
    $region3: #{tpu_custom_call.1} parent=1 // loop_header
      %s17 = sphi 0, %s21
      %p18 = scmp.ge.s32.totalorder %s17, 4
      %s24 = sphi 0, %s36
      %s25 = sphi 0, %s32
      %s26 = sphi 0, %s24
      %s27 = sphi 0, %s25
      %s28 = sphi 0, %s26
      %s29 = sphi 0, %s27
      %s41 = sphi 0, %s43
      %s44 = sphi 0, %s41
      %s45 = sphi 0, %s44
      %s61 = sphi 0, %s45
      %s69 = sphi 0, %s71
      %s72 = sphi 0, %s69
      %s73 = sphi 0, %s72
      %s89 = sphi 0, %s73
      %s95 = sphi 0, %s97
      %s98 = sphi 0, %s95
      %s99 = sphi 0, %s98
      %s115 = sphi 0, %s99
    $region4: #{tpu_custom_call.1} parent=1 // loop_header_branch
      %20 = sbr.rel (%p18) target = $region8
    $region5: #{tpu_custom_call.1} parent=1 // loop_body
      %s22 = ssub.s32 %s17, 1
      %s23 = ssub.s32 %s17, 2
      %s30 = sadd.s32 1, %s25
      %p31 = scmp.ge.s32.totalorder %s30, 1
      %s32 = scalar_select %p31, 0, %s30
      %s33 = sadd.s32 1, %s24
      %s34 = scalar_select %p31, %s33, %s24
      %p35 = scmp.ge.s32.totalorder %s34, 2
      %s36 = scalar_select %p35, 0, %s34
      %s37 = ssub.s32 %s24, %s36
      %s38 = ssub.s32 %s25, %s32
      %s39 = sor.u32 %s37, %s38
      %p40 = scmp.eq.s32.totalorder %s39, 0
      %s42 = sadd.s32 %s41, 1
      %s43 = scalar_select %p40, %s41, %s42
      %p46 = pneg %p40
      %p47 = scmp.eq.s32.totalorder %s17, 1
      %p48 = por %p46, %p47
      %p49 = scmp.ne.s32.totalorder %s41, %s44
      %p50 = scmp.eq.s32.totalorder %s17, 0
      %p51 = por %p49, %p50
      %p52 = scmp.ne.s32.totalorder %s41, %s44
      %p53 = scmp.eq.s32.totalorder %s22, 1
      %p54 = por %p52, %p53
      %p55 = scmp.ne.s32.totalorder %s44, %s45
      %p56 = scmp.eq.s32.totalorder %s22, 0
      %p57 = por %p55, %p56
      %p58 = scmp.ne.s32.totalorder %s44, %s45
      %p59 = scmp.eq.s32.totalorder %s23, 1
      %p60 = por %p58, %p59
      %p62 = scmp.ne.s32.totalorder %s45, %s61
      %p63 = scmp.eq.s32.totalorder %s23, 0
      %p64 = por %p62, %p63
      %s65 = ssub.s32 %s24, %s36
      %s66 = ssub.s32 %s25, %s32
      %s67 = sor.u32 %s65, %s66
      %p68 = scmp.eq.s32.totalorder %s67, 0
      %s70 = sadd.s32 %s69, 1
      %s71 = scalar_select %p68, %s69, %s70
      %p74 = pneg %p68
      %p75 = scmp.eq.s32.totalorder %s17, 1
      %p76 = por %p74, %p75
      %p77 = scmp.ne.s32.totalorder %s69, %s72
      %p78 = scmp.eq.s32.totalorder %s17, 0
      %p79 = por %p77, %p78
      %p80 = scmp.ne.s32.totalorder %s69, %s72
      %p81 = scmp.eq.s32.totalorder %s22, 1
      %p82 = por %p80, %p81
      %p83 = scmp.ne.s32.totalorder %s72, %s73
      %p84 = scmp.eq.s32.totalorder %s22, 0
      %p85 = por %p83, %p84
      %p86 = scmp.ne.s32.totalorder %s72, %s73
      %p87 = scmp.eq.s32.totalorder %s23, 1
      %p88 = por %p86, %p87
      %p90 = scmp.ne.s32.totalorder %s73, %s89
      %p91 = scmp.eq.s32.totalorder %s23, 0
      %p92 = por %p90, %p91
      %s93 = ssub.s32 %s24, %s36
      %p94 = scmp.eq.s32.totalorder %s93, 0
      %s96 = sadd.s32 %s95, 1
      %s97 = scalar_select %p94, %s95, %s96
      %p100 = pneg %p94
      %p101 = scmp.eq.s32.totalorder %s17, 1
      %p102 = por %p100, %p101
      %p103 = scmp.ne.s32.totalorder %s95, %s98
      %p104 = scmp.eq.s32.totalorder %s17, 0
      %p105 = por %p103, %p104
      %p106 = scmp.ne.s32.totalorder %s95, %s98
      %p107 = scmp.eq.s32.totalorder %s22, 1
      %p108 = por %p106, %p107
      %p109 = scmp.ne.s32.totalorder %s98, %s99
      %p110 = scmp.eq.s32.totalorder %s22, 0
      %p111 = por %p109, %p110
      %p112 = scmp.ne.s32.totalorder %s98, %s99
      %p113 = scmp.eq.s32.totalorder %s23, 1
      %p114 = por %p112, %p113
      %p116 = scmp.ne.s32.totalorder %s99, %s115
      %p117 = scmp.eq.s32.totalorder %s23, 0
      %p118 = por %p116, %p117
      %p119 = scmp.le.s32.totalorder 1, %s17
      %p120 = scmp.lt.s32.totalorder %s17, 3
      %p121 = pnand %p119, %p120
      %p122 = pneg %p121
      // Predicated region
      $region9: #{tpu_custom_call.1} parent=5 // pred_check
        _
      $region10: #{tpu_custom_call.1} parent=5 // pred_check_branch
        %124 = sbr.rel (%p121) target = $region12
      $region11: #{tpu_custom_call.1} parent=5 // pred_region
        %s125 = ssub.s32 %s17, 1
      $region12: #{tpu_custom_call.1} parent=5 // pred_fallthru
        _
      %p126 = scmp.lt.s32.totalorder %s17, 2
      // Predicated region
      $region13: #{tpu_custom_call.1} parent=5 // pred_check
        %p127 = pneg %p126
      $region14: #{tpu_custom_call.1} parent=5 // pred_check_branch
        %129 = sbr.rel (%p127) target = $region16
      $region15: #{tpu_custom_call.1} parent=5 // pred_region
        // Predicated region
        $region17: #{tpu_custom_call.1} parent=15 // pred_check
          %p130 = pneg %p51
        $region18: #{tpu_custom_call.1} parent=15 // pred_check_branch
          %132 = sbr.rel (%p130) target = $region20
        $region19: #{tpu_custom_call.1} parent=15 // pred_region
          %s133 = sand.u32 %s41, 1
          %s134 = scalar_lea.sflag [#allocation5], %s133
          %s135 = sand.u32 %s41, 1
          %s136 = smul.addr %s135, 8
          %s137 = scalar_lea.vmem [#allocation4], %s136
          %s139 = ssub.s32 128, 128
          %140 = vsyncadd %s134, %s139
          %s141 = sadd.s32 %s25, %s24
          %s142 = smul.addr %s141, 128
          %s143 = scalar_lea.hbm %s0, %s142
          %s145 = sshll.u32 %s137, 4
          %s146 = int_to_ptr.vmem [resolvable:$true] %s145
          %148 = dma.hbm_to_vmem [thread:$0]  %s143, 128, %s146, %s134
        $region20: #{tpu_custom_call.1} parent=15 // pred_fallthru
          _
        // Predicated region
        $region21: #{tpu_custom_call.1} parent=15 // pred_check
          %p149 = pneg %p79
        $region22: #{tpu_custom_call.1} parent=15 // pred_check_branch
          %151 = sbr.rel (%p149) target = $region24
        $region23: #{tpu_custom_call.1} parent=15 // pred_region
          %s152 = sand.u32 %s69, 1
          %s153 = scalar_lea.sflag [#allocation8], %s152
          %s154 = sand.u32 %s69, 1
          %s155 = smul.addr %s154, 8
          %s156 = scalar_lea.vmem [#allocation7], %s155
          %s158 = ssub.s32 128, 128
          %159 = vsyncadd %s153, %s158
          %s160 = sadd.s32 %s25, %s24
          %s161 = smul.addr %s160, 128
          %s162 = scalar_lea.hbm %s1, %s161
          %s164 = sshll.u32 %s156, 4
          %s165 = int_to_ptr.vmem [resolvable:$true] %s164
          %167 = dma.hbm_to_vmem [thread:$0]  %s162, 128, %s165, %s153
        $region24: #{tpu_custom_call.1} parent=15 // pred_fallthru
          _
      $region16: #{tpu_custom_call.1} parent=5 // pred_fallthru
        _
      %p168 = scmp.le.s32.totalorder 1, %s17
      %p169 = scmp.lt.s32.totalorder %s17, 3
      %p170 = pnand %p168, %p169
      %p171 = pneg %p170
      // Predicated region
      $region25: #{tpu_custom_call.1} parent=5 // pred_check
        _
      $region26: #{tpu_custom_call.1} parent=5 // pred_check_branch
        %173 = sbr.rel (%p170) target = $region28
      $region27: #{tpu_custom_call.1} parent=5 // pred_region
        %s174 = ssub.s32 %s17, 1
        %s175 = sand.u32 %s44, 1
        %s176 = scalar_lea.sflag [#allocation5], %s175
        %s177 = sand.u32 %s44, 1
        %s178 = smul.addr %s177, 8
        %s179 = scalar_lea.vmem [#allocation4], %s178
        // Predicated region
        $region29: #{tpu_custom_call.1} parent=27 // pred_check
          %p180 = pneg %p57
        $region30: #{tpu_custom_call.1} parent=27 // pred_check_branch
          %182 = sbr.rel (%p180) target = $region32
        $region31: #{tpu_custom_call.1} parent=27 // pred_region
          %183 = dma.done %s176, 128
        $region32: #{tpu_custom_call.1} parent=27 // pred_fallthru
          _
        %s184 = sand.u32 %s72, 1
        %s185 = scalar_lea.sflag [#allocation8], %s184
        %s186 = sand.u32 %s72, 1
        %s187 = smul.addr %s186, 8
        %s188 = scalar_lea.vmem [#allocation7], %s187
        // Predicated region
        $region33: #{tpu_custom_call.1} parent=27 // pred_check
          %p189 = pneg %p85
        $region34: #{tpu_custom_call.1} parent=27 // pred_check_branch
          %191 = sbr.rel (%p189) target = $region36
        $region35: #{tpu_custom_call.1} parent=27 // pred_region
          %192 = dma.done %s185, 128
        $region36: #{tpu_custom_call.1} parent=27 // pred_fallthru
          _
        %s193 = sand.u32 %s44, 1
        %s194 = scalar_lea.sflag [#allocation5], %s193
        %s195 = sand.u32 %s44, 1
        %s196 = smul.addr %s195, 8
        %s197 = scalar_lea.vmem [#allocation4], %s196
        %p198 = pneg %p57
        %p199 = pneg %p54
        %s200 = sand.u32 %s72, 1
        %s201 = scalar_lea.sflag [#allocation8], %s200
        %s202 = sand.u32 %s72, 1
        %s203 = smul.addr %s202, 8
        %s204 = scalar_lea.vmem [#allocation7], %s203
        %p205 = pneg %p85
        %p206 = pneg %p82
        %p207 = pneg %p111
        %p208 = pneg %p108
        %s209 = sand.u32 %s98, 1
        %s210 = scalar_lea.sflag [#allocation6], %s209
        %s211 = sand.u32 %s98, 1
        %s212 = smul.addr %s211, 8
        %s213 = scalar_lea.vmem [#allocation9], %s212
        %v214 = vld [vmem:[%s179] sm:$0xff]
        %v215 = vld [vmem:[%s188] sm:$0xff]
        %v216 = vmul.f32 %v215, %v214
        %v217 = vrot.slane %v216, 4
        %v218 = vadd.f32 %v216, %v217
        %v219 = vrot.slane %v218, 2
        %v220 = vadd.f32 %v218, %v219
        %v221 = vrot.slane %v220, 1
        %v222 = vadd.f32 %v220, %v221
        %v223 = vadd.f32 %v215, %v214
        %v224 = vrot.slane %v223, 4
        %v225 = vadd.f32 %v223, %v224
        %v226 = vrot.slane %v225, 2
        %v227 = vadd.f32 %v225, %v226
        %v228 = vrot.slane %v227, 1
        %v229 = vadd.f32 %v227, %v228
        %p230 = scmp.eq.s32.totalorder %s27, 0
        // Predicated region
        $region37: #{tpu_custom_call.1} parent=27 // pred_check
          %p231 = pneg %p230
        $region38: #{tpu_custom_call.1} parent=27 // pred_check_branch
          %233 = sbr.rel (%p231) target = $region40
        $region39: #{tpu_custom_call.1} parent=27 // pred_region
          %234 = vst [vmem:[#allocation2] sm:$0x1] 0.0
          %235 = vst [vmem:[#allocation3] sm:$0x1] 0.0
        $region40: #{tpu_custom_call.1} parent=27 // pred_fallthru
          _
        %v236 = vld [vmem:[#allocation2] sm:$0x1]
        %v237 = vadd.f32 %v236, %v222
        %238 = vst [vmem:[#allocation2] sm:$0x1] %v237
        %v239 = vld [vmem:[#allocation3] sm:$0x1]
        %v240 = vadd.f32 %v239, %v229
        %241 = vst [vmem:[#allocation3] sm:$0x1] %v240
        // Predicated region
        $region41: #{tpu_custom_call.1} parent=27 // pred_check
          %p242 = pneg %p230
        $region42: #{tpu_custom_call.1} parent=27 // pred_check_branch
          %244 = sbr.rel (%p242) target = $region44
        $region43: #{tpu_custom_call.1} parent=27 // pred_region
          %v245 = vld [vmem:[#allocation2] sm:$0x1]
          %vm246 = vcmask 1040384
          %v247 = vsel %vm246, %v245, 0.0
          %248 = vadd.xlane.f32.xlu0 %v247
          %v249 = vpop.xlane.xlu0 %248
          %v250 = vrot.slane %v249, 4
          %v251 = vadd.f32 %v249, %v250
          %v252 = vrot.slane %v251, 2
          %v253 = vadd.f32 %v251, %v252
          %v254 = vrot.slane %v253, 1
          %v255 = vadd.f32 %v253, %v254
          %s256 = vtos %v255
          %v257 = vld [vmem:[#allocation3] sm:$0x1]
          %v258 = vsel %vm246, %v257, 0.0
          %259 = vadd.xlane.f32.xlu0 %v258
          %v260 = vpop.xlane.xlu0 %259
          %v261 = vrot.slane %v260, 4
          %v262 = vadd.f32 %v260, %v261
          %v263 = vrot.slane %v262, 2
          %v264 = vadd.f32 %v262, %v263
          %v265 = vrot.slane %v264, 1
          %v266 = vadd.f32 %v264, %v265
          %s267 = vtos %v266
          %s268 = ssub.f32 %s267, %s256
          %v269 = vstv %s268
          %v270 = vrcp.pop %v269
          %s271 = vtos %v270
          %s272 = smul.f32 %s256, %s271
          %s273 = ssub.f32 1.0, %s272
          %v274 = vstv %s273
          %275 = vst [vmem:[%s213] sm:$0xff] %v274
        $region44: #{tpu_custom_call.1} parent=27 // pred_fallthru
          _
        %s276 = sand.u32 %s98, 1
        %s277 = scalar_lea.sflag [#allocation6], %s276
        %s278 = sand.u32 %s98, 1
        %s279 = smul.addr %s278, 8
        %s280 = scalar_lea.vmem [#allocation9], %s279
        // Predicated region
        $region45: #{tpu_custom_call.1} parent=27 // pred_check
          %p281 = pneg %p108
        $region46: #{tpu_custom_call.1} parent=27 // pred_check_branch
          %283 = sbr.rel (%p281) target = $region48
        $region47: #{tpu_custom_call.1} parent=27 // pred_region
          %s285 = ssub.s32 128, 128
          %286 = vsyncadd %s277, %s285
          %s287 = smul.addr %s26, 128
          %s288 = scalar_lea.hbm %s2, %s287
          %s290 = sshll.u32 %s280, 4
          %s291 = int_to_ptr.vmem [resolvable:$true] %s290
          %293 = dma.vmem_to_hbm [thread:$0]  %s291, 128, %s288, %s277
        $region48: #{tpu_custom_call.1} parent=27 // pred_fallthru
          _
      $region28: #{tpu_custom_call.1} parent=5 // pred_fallthru
        _
      %p294 = scmp.le.s32.totalorder 2, %s17
      // Predicated region
      $region49: #{tpu_custom_call.1} parent=5 // pred_check
        %p295 = pneg %p294
      $region50: #{tpu_custom_call.1} parent=5 // pred_check_branch
        %297 = sbr.rel (%p295) target = $region52
      $region51: #{tpu_custom_call.1} parent=5 // pred_region
        %s298 = ssub.s32 %s17, 2
        // Predicated region
        $region53: #{tpu_custom_call.1} parent=51 // pred_check
          %p299 = pneg %p114
        $region54: #{tpu_custom_call.1} parent=51 // pred_check_branch
          %301 = sbr.rel (%p299) target = $region56
        $region55: #{tpu_custom_call.1} parent=51 // pred_region
          %s302 = sand.u32 %s99, 1
          %s303 = scalar_lea.sflag [#allocation6], %s302
          %s304 = sand.u32 %s99, 1
          %s305 = smul.addr %s304, 8
          %s306 = scalar_lea.vmem [#allocation9], %s305
          %307 = dma.done %s303, 128
        $region56: #{tpu_custom_call.1} parent=51 // pred_fallthru
          _
      $region52: #{tpu_custom_call.1} parent=5 // pred_fallthru
        _
    $region6: #{tpu_custom_call.1} parent=1 // loop_footer
      %s21 = sadd.s32 1, %s17
    $region7: #{tpu_custom_call.1} parent=1 // loop_footer_branch
      %16 = sbr.rel target = $region3
    $region8: #{tpu_custom_call.1} parent=1 // loop_exit
      _
    %308 = vsyncpa [#allocation5], 1
    %s309 = scalar_lea.sflag [#allocation5], 1
    %310 = vsyncpa %s309, 1
    %311 = vsyncpa [#allocation8], 1
    %s312 = scalar_lea.sflag [#allocation8], 1
    %313 = vsyncpa %s312, 1
    %314 = vsyncpa [#allocation6], 1
    %s315 = scalar_lea.sflag [#allocation6], 1
    %316 = vsyncpa %s315, 1

</llo_original>
